<compile_context>
chip_gen: v7x
topology: tpu7x:2x2x1
jax: 0.10.0
libtpu: 0.0.40
codegen_flags: <defaults>
</compile_context>

<pallas_src>
import jax
import jax.numpy as jnp
from jax.experimental import pallas as pl
from jax.experimental.pallas import tpu as pltpu


LANE = 128      # lane width: feature / contraction dims padded to multiples
SUBLANE = 8     # sublane granularity for the batch tile

_HAS_BUFFERED = hasattr(pl, "Buffered")


def _round_up(n, m):
    return ((n + m - 1) // m) * m


def _const_spec(shape):
    """Constant-index BlockSpec (operand resident across the whole grid)."""
    if _HAS_BUFFERED:
        try:
            return pl.BlockSpec(shape, lambda i: (0, 0),
                                pipeline_mode=pl.Buffered(1))
        except TypeError:
            pass
    return pl.BlockSpec(shape, lambda i: (0, 0))


def _vmem_capacity_bytes():
    try:
        return int(pltpu.get_tpu_info().vmem_capacity_bytes)
    except Exception:
        return 64 << 20   # conservative default = v7x per-TC physical VMEM


# --------------------------------------------------------------------------
# Kernel
# --------------------------------------------------------------------------
def make_mlp_embedder_kernel(embed_dim, embed_pad, *, eps=1e-5, use_bf16=True):
    """Fused We -> 2x(MLPBlock) forward kernel for one (TM, feat) batch tile."""

    inv_d = 1.0 / float(embed_dim)
    mm_dtype = jnp.bfloat16 if use_bf16 else jnp.float32

    def kernel(x_ref,
               we_w_ref, w1a_ref, w2a_ref, w1b_ref, w2b_ref,
               emb_vec_ref, hid_vec_ref,
               o_ref):

        # Stacked f32 bias / gamma / beta rows (static slices -> free views).
        we_b = emb_vec_ref[0:1, :]
        b2a = emb_vec_ref[1:2, :]
        ga = emb_vec_ref[2:3, :]
        ba = emb_vec_ref[3:4, :]
        b2b = emb_vec_ref[4:5, :]
        gb = emb_vec_ref[5:6, :]
        bb = emb_vec_ref[6:7, :]
        b1a = hid_vec_ref[0:1, :]
        b1b = hid_vec_ref[1:2, :]

        # Lane mask for the padded feature dimension (static shapes).
        if embed_pad != embed_dim:
            lane = jax.lax.broadcasted_iota(jnp.int32, (1, embed_pad), 1)
            lane_mask = (lane < embed_dim).astype(jnp.float32)
        else:
            lane_mask = None

        def linear(h, w_ref, b):
            # Weights are already stored in mm_dtype (bf16): activations cast
            # once per matmul, f32 accumulation, f32 bias add.
            return (jnp.dot(h.astype(mm_dtype), w_ref[...],
                            preferred_element_type=jnp.float32) + b)

        def mlp_block(h, w1_ref, b1, w2_ref, b2, g, beta):
            m = jnp.maximum(linear(h, w1_ref, b1), 0.0)   # Linear -> ReLU
            o = linear(m, w2_ref, b2)                     # -> Linear
            r = o + h                                     # residual
            # LayerNorm over the unpadded width, all in f32.
            # Padded lanes of r are exactly 0 (weights/biases zero-padded), so
            # sum/embed_dim is the true mean.
            mu = jnp.sum(r, axis=-1, keepdims=True) * inv_d
            c = r - mu
            if lane_mask is not None:
                c = c * lane_mask                         # zero padded lanes
            var = jnp.sum(c * c, axis=-1, keepdims=True) * inv_d
            y = c * jax.lax.rsqrt(var + eps)
            # gamma/beta are zero-padded, so padded output lanes stay 0.
            # Dropout: identity (eval mode).
            # TODO(synk): training-mode dropout would use pltpu.prng_seed /
            #             pltpu.prng_random_bits to build a keep-mask.
            return y * g + beta

        h = linear(x_ref[...], we_w_ref, we_b)            # We: inp -> embed
        h = mlp_block(h, w1a_ref, b1a, w2a_ref, b2a, ga, ba)
        h = mlp_block(h, w1b_ref, b1b, w2b_ref, b2b, gb, bb)
        o_ref[...] = h.astype(o_ref.dtype)

    return kernel


# --------------------------------------------------------------------------
# Parameter preparation (zero-pad matmul dims to x128, bf16 weights, slabs)
# --------------------------------------------------------------------------
def _pad2(a, rows, cols):
    return jnp.pad(a, ((0, rows - a.shape[0]), (0, cols - a.shape[1])))


def prepare_params(params, *, use_bf16=True):
    (we_w, we_b,
     w1a, b1a, w2a, b2a, ga, ba,
     w1b, b1b, w2b, b2b, gb, bb) = params
    inp_dim, embed_dim = we_w.shape
    hidden = w1a.shape[1]
    inp_p = _round_up(inp_dim, LANE)
    emb_p = _round_up(embed_dim, LANE)
    hid_p = _round_up(hidden, LANE)
    wdt = jnp.bfloat16 if use_bf16 else jnp.float32

    # INVARIANT: every padded row/column/lane below must be exactly zero —
    # the in-kernel masked LayerNorm and residual depend on it.
    weights = (
        _pad2(we_w, inp_p, emb_p).astype(wdt),
        _pad2(w1a, emb_p, hid_p).astype(wdt),
        _pad2(w2a, hid_p, emb_p).astype(wdt),
        _pad2(w1b, emb_p, hid_p).astype(wdt),
        _pad2(w2b, hid_p, emb_p).astype(wdt),
    )

    # Consolidated f32 bias / gamma / beta slabs (one DMA each).
    emb_rows = (we_b, b2a, ga, ba, b2b, gb, bb)
    emb_slab = jnp.zeros((8, emb_p), jnp.float32)
    for r, v in enumerate(emb_rows):
        emb_slab = emb_slab.at[r, : v.shape[1]].set(v[0])
    hid_slab = jnp.zeros((8, hid_p), jnp.float32)
    for r, v in enumerate((b1a, b1b)):
        hid_slab = hid_slab.at[r, : v.shape[1]].set(v[0])

    return (weights, emb_slab, hid_slab,
            (inp_dim, embed_dim, hidden), (inp_p, emb_p, hid_p))


# --------------------------------------------------------------------------
# Host wrapper
# --------------------------------------------------------------------------
def mlp_embedder_forward(x, params, *, tm=None, use_bf16=True):
    """x: (batch, inp_dim) float32. params: flat tuple (see init_params)."""
    batch, inp_dim = x.shape
    (weights, emb_slab, hid_slab,
     (inp_dim_, embed_dim, hidden), (inp_p, emb_p, hid_p)) = prepare_params(
         params, use_bf16=use_bf16)
    assert inp_dim == inp_dim_

    wbytes = 2 if use_bf16 else 4
    weight_buf_factor = 1 if _HAS_BUFFERED else 2   # Buffered(1) vs default x2
    resident_bytes = (sum(int(w.size) for w in weights) * wbytes
                      + (int(emb_slab.size) + int(hid_slab.size)) * 4)

    vmem_cap = _vmem_capacity_bytes()
    usable = max(16 << 20, vmem_cap - (8 << 20))    # headroom for Mosaic scratch

    def budget(t):
        act = 2 * t * (inp_p + emb_p) * 4                       # dbl-buffered f32 in/out
        tmp = t * (hid_p + 3 * emb_p) * 4 + t * (hid_p + emb_p) * 2  # f32 temps + bf16 casts
        return weight_buf_factor * resident_bytes + act + tmp

    if budget(SUBLANE) > usable:
        # TODO(synk): K/N-tiled fallback with a VMEM f32 accumulator for embed
        #             dims whose weights cannot stay resident in VMEM.
        raise NotImplementedError(
            f"resident weights ({resident_bytes >> 20} MiB) exceed the VMEM "
            f"budget ({usable >> 20} MiB); a K/N-tiled fallback is required.")

    batch_r = _round_up(batch, SUBLANE)
    if tm is None:
        tm = SUBLANE
        for cand in (1024, 512, 256, 128, 64, 32, 16, 8):
            if cand > batch_r:
                continue
            # Keep >= 2 grid steps whenever the batch is splittable, so both
            # v7x TensorCores get work (no-op on single-TC v5e/v6e).
            if batch_r >= 2 * SUBLANE and cand > batch_r // 2:
                continue
            if budget(cand) <= usable:
                tm = cand
                break
    else:
        tm = max(SUBLANE, _round_up(tm, SUBLANE))

    batch_p = _round_up(batch, tm)
    grid = (batch_p // tm,)

    x_p = jnp.pad(x, ((0, batch_p - batch), (0, inp_p - inp_dim)))

    kernel = make_mlp_embedder_kernel(embed_dim, emb_p, use_bf16=use_bf16)

    in_specs = ([pl.BlockSpec((tm, inp_p), lambda i: (i, 0))]
                + [_const_spec(w.shape) for w in weights]
                + [_const_spec(emb_slab.shape), _const_spec(hid_slab.shape)])
    out_spec = pl.BlockSpec((tm, emb_p), lambda i: (i, 0))

    vmem_limit = int(min(max(budget(tm) + (4 << 20), 16 << 20), usable))

    flops = 2 * batch_p * (inp_p * emb_p + 2 * (emb_p * hid_p + hid_p * emb_p))
    bytes_accessed = (batch_p * inp_p * 4        # activation stream in (f32)
                      + batch_p * emb_p * 4      # output stream (f32)
                      + resident_bytes)          # weights DMA'd once
    cost = pl.CostEstimate(flops=int(flops), transcendentals=2 * batch_p,
                           bytes_accessed=int(bytes_accessed))

    out = pl.pallas_call(
        kernel,
        out_shape=jax.ShapeDtypeStruct((batch_p, emb_p), jnp.float32),
        grid=grid,
        in_specs=in_specs,
        out_specs=out_spec,
        compiler_params=pltpu.CompilerParams(
            dimension_semantics=("parallel",),    # megacore sharding on v7x
            vmem_limit_bytes=vmem_limit),
        cost_estimate=cost,
    )(x_p, *weights, emb_slab, hid_slab)

    return out[:batch, :embed_dim]


# --------------------------------------------------------------------------
# Init + pure-JAX reference
# --------------------------------------------------------------------------
def init_params(key, inp_dim, embed_dim, mlp_embed_factor=2, num_encoder_units=2):
    """Deterministic parameter init; Linear weights stored as (in, out)."""
    hidden = embed_dim * mlp_embed_factor
    keys = jax.random.split(key, 1 + 2 * num_encoder_units)

    def lin(k, fan_in, fan_out):
        bound = 1.0 / jnp.sqrt(fan_in)
        kw, kb = jax.random.split(k)
        w = jax.random.uniform(kw, (fan_in, fan_out), jnp.float32, -bound, bound)
        b = jax.random.uniform(kb, (1, fan_out), jnp.float32, -bound, bound)
        return w, b

    params = []
    we_w, we_b = lin(keys[0], inp_dim, embed_dim)              # We
    params += [we_w, we_b]
    for u in range(num_encoder_units):
        k1, k2 = keys[1 + 2 * u], keys[2 + 2 * u]
        w1, b1 = lin(k1, embed_dim, hidden)                    # Linear(embed, embed*f)
        w2, b2 = lin(k2, hidden, embed_dim)                    # Linear(embed*f, embed)
        gamma = jnp.ones((1, embed_dim), jnp.float32)          # LayerNorm weight
        beta = jnp.zeros((1, embed_dim), jnp.float32)          # LayerNorm bias
        params += [w1, b1, w2, b2, gamma, beta]
    return tuple(params)


def reference_forward(x, params):
    """Pure-JAX f32 reference for correctness check."""
    (we_w, we_b,
     w1a, b1a, w2a, b2a, ga, ba,
     w1b, b1b, w2b, b2b, gb, bb) = params

    def block(h, w1, b1, w2, b2, g, be):
        m = jnp.maximum(h @ w1 + b1, 0.0)
        o = m @ w2 + b2
        r = o + h
        mu = jnp.mean(r, axis=-1, keepdims=True)
        var = jnp.mean((r - mu) ** 2, axis=-1, keepdims=True)
        return (r - mu) / jnp.sqrt(var + 1e-5) * g + be

    h = x @ we_w + we_b
    h = block(h, w1a, b1a, w2a, b2a, ga, ba)
    h = block(h, w1b, b1b, w2b, b2b, gb, bb)
    return h


if __name__ == "__main__":
    batch, inp_dim, embed_dim = 16, 16, 32

    key = jax.random.PRNGKey(0)
    kx, kp = jax.random.split(key)
    x = jax.random.normal(kx, (batch, inp_dim), jnp.float32)
    params = init_params(kp, inp_dim, embed_dim, mlp_embed_factor=2,
                         num_encoder_units=2)

    # Auto tm -> 8 at this toy batch (2 grid steps), exercising the pipelined path.
    out = mlp_embedder_forward(x, params, use_bf16=True)
    out = jax.block_until_ready(out)

    ref = reference_forward(x, params)
    assert out.shape == (batch, embed_dim)
    # bf16 matmul operands (f32 accumulation) vs. full-f32 reference.
    max_err = float(jnp.max(jnp.abs(out - ref)))
    assert jnp.allclose(out, ref, atol=3e-2, rtol=3e-2), (
        f"mismatch vs JAX reference (max abs err {max_err})")

    print("KERNEL_OK")
</pallas_src>

<mosaic_0001>
module attributes {stable_mosaic.version = 11 : i64} {
  func.func @kernel(%arg0: i32, %arg1: memref<8x128xf32, #tpu.memory_space<vmem>>, %arg2: memref<128x128xbf16, #tpu.memory_space<vmem>>, %arg3: memref<128x128xbf16, #tpu.memory_space<vmem>>, %arg4: memref<128x128xbf16, #tpu.memory_space<vmem>>, %arg5: memref<128x128xbf16, #tpu.memory_space<vmem>>, %arg6: memref<128x128xbf16, #tpu.memory_space<vmem>>, %arg7: memref<8x128xf32, #tpu.memory_space<vmem>>, %arg8: memref<8x128xf32, #tpu.memory_space<vmem>>, %arg9: memref<8x128xf32, #tpu.memory_space<vmem>>) attributes {dimension_semantics = [#tpu.dimension_semantics<parallel>], iteration_bounds = array<i64: 2>, scalar_prefetch = 0 : i64, scratch_operands = 0 : i64, tpu.core_type = #tpu.core_type<tc>, window_params = [{transform_indices = @transform_0, window_bounds = array<i64: 8, 128>}, {pipeline_mode = #tpu.pipeline_mode<synchronous>, transform_indices = @transform_1, window_bounds = array<i64: 128, 128>}, {pipeline_mode = #tpu.pipeline_mode<synchronous>, transform_indices = @transform_2, window_bounds = array<i64: 128, 128>}, {pipeline_mode = #tpu.pipeline_mode<synchronous>, transform_indices = @transform_3, window_bounds = array<i64: 128, 128>}, {pipeline_mode = #tpu.pipeline_mode<synchronous>, transform_indices = @transform_4, window_bounds = array<i64: 128, 128>}, {pipeline_mode = #tpu.pipeline_mode<synchronous>, transform_indices = @transform_5, window_bounds = array<i64: 128, 128>}, {pipeline_mode = #tpu.pipeline_mode<synchronous>, transform_indices = @transform_6, window_bounds = array<i64: 8, 128>}, {pipeline_mode = #tpu.pipeline_mode<synchronous>, transform_indices = @transform_7, window_bounds = array<i64: 8, 128>}, {transform_indices = @transform_8, window_bounds = array<i64: 8, 128>}]} {
    %c0 = arith.constant 0 : index
    %c0_0 = arith.constant 0 : index
    %0 = vector.load %arg7[%c0, %c0_0] : memref<8x128xf32, #tpu.memory_space<vmem>>, vector<1x128xf32>
    %c1 = arith.constant 1 : index
    %c0_1 = arith.constant 0 : index
    %1 = vector.load %arg7[%c1, %c0_1] : memref<8x128xf32, #tpu.memory_space<vmem>>, vector<1x128xf32>
    %c2 = arith.constant 2 : index
    %c0_2 = arith.constant 0 : index
    %2 = vector.load %arg7[%c2, %c0_2] : memref<8x128xf32, #tpu.memory_space<vmem>>, vector<1x128xf32>
    %c3 = arith.constant 3 : index
    %c0_3 = arith.constant 0 : index
    %3 = vector.load %arg7[%c3, %c0_3] : memref<8x128xf32, #tpu.memory_space<vmem>>, vector<1x128xf32>
    %c4 = arith.constant 4 : index
    %c0_4 = arith.constant 0 : index
    %4 = vector.load %arg7[%c4, %c0_4] : memref<8x128xf32, #tpu.memory_space<vmem>>, vector<1x128xf32>
    %c5 = arith.constant 5 : index
    %c0_5 = arith.constant 0 : index
    %5 = vector.load %arg7[%c5, %c0_5] : memref<8x128xf32, #tpu.memory_space<vmem>>, vector<1x128xf32>
    %c6 = arith.constant 6 : index
    %c0_6 = arith.constant 0 : index
    %6 = vector.load %arg7[%c6, %c0_6] : memref<8x128xf32, #tpu.memory_space<vmem>>, vector<1x128xf32>
    %c0_7 = arith.constant 0 : index
    %c0_8 = arith.constant 0 : index
    %7 = vector.load %arg8[%c0_7, %c0_8] : memref<8x128xf32, #tpu.memory_space<vmem>>, vector<1x128xf32>
    %c1_9 = arith.constant 1 : index
    %c0_10 = arith.constant 0 : index
    %8 = vector.load %arg8[%c1_9, %c0_10] : memref<8x128xf32, #tpu.memory_space<vmem>>, vector<1x128xf32>
    %9 = tpu.iota {dimensions = array<i32: 1>} : vector<1x128xi32>
    %c32_i32 = arith.constant 32 : i32
    %10 = vector.broadcast %c32_i32 : i32 to vector<1x128xi32>
    %11 = arith.cmpi slt, %9, %10 : vector<1x128xi32>
    %12 = arith.extui %11 : vector<1x128xi1> to vector<1x128xi32>
    %13 = arith.sitofp %12 : vector<1x128xi32> to vector<1x128xf32>
    %c0_11 = arith.constant 0 : index
    %c0_12 = arith.constant 0 : index
    %14 = vector.load %arg1[%c0_11, %c0_12] : memref<8x128xf32, #tpu.memory_space<vmem>>, vector<8x128xf32>
    %15 = arith.truncf %14 : vector<8x128xf32> to vector<8x128xbf16>
    %c0_13 = arith.constant 0 : index
    %c0_14 = arith.constant 0 : index
    %16 = vector.load %arg2[%c0_13, %c0_14] : memref<128x128xbf16, #tpu.memory_space<vmem>>, vector<128x128xbf16>
    %cst = arith.constant dense<0.000000e+00> : vector<8x128xf32>
    %17 = tpu.matmul %15, %16, %cst {dimension_numbers = #tpu.dot_dimension_numbers<[1], [0], [0], [1], [0, 0, 1, 1], [], []>} : vector<8x128xbf16>, vector<128x128xbf16>, vector<8x128xf32> -> vector<8x128xf32>
    %18 = vector.broadcast %0 : vector<1x128xf32> to vector<8x128xf32>
    %19 = arith.addf %17, %18 : vector<8x128xf32>
    %20 = arith.truncf %19 : vector<8x128xf32> to vector<8x128xbf16>
    %c0_15 = arith.constant 0 : index
    %c0_16 = arith.constant 0 : index
    %21 = vector.load %arg3[%c0_15, %c0_16] : memref<128x128xbf16, #tpu.memory_space<vmem>>, vector<128x128xbf16>
    %cst_17 = arith.constant dense<0.000000e+00> : vector<8x128xf32>
    %22 = tpu.matmul %20, %21, %cst_17 {dimension_numbers = #tpu.dot_dimension_numbers<[1], [0], [0], [1], [0, 0, 1, 1], [], []>} : vector<8x128xbf16>, vector<128x128xbf16>, vector<8x128xf32> -> vector<8x128xf32>
    %23 = vector.broadcast %7 : vector<1x128xf32> to vector<8x128xf32>
    %24 = arith.addf %22, %23 : vector<8x128xf32>
    %cst_18 = arith.constant 0.000000e+00 : f32
    %25 = vector.broadcast %cst_18 : f32 to vector<8x128xf32>
    %26 = arith.maximumf %24, %25 : vector<8x128xf32>
    %27 = arith.truncf %26 : vector<8x128xf32> to vector<8x128xbf16>
    %c0_19 = arith.constant 0 : index
    %c0_20 = arith.constant 0 : index
    %28 = vector.load %arg4[%c0_19, %c0_20] : memref<128x128xbf16, #tpu.memory_space<vmem>>, vector<128x128xbf16>
    %cst_21 = arith.constant dense<0.000000e+00> : vector<8x128xf32>
    %29 = tpu.matmul %27, %28, %cst_21 {dimension_numbers = #tpu.dot_dimension_numbers<[1], [0], [0], [1], [0, 0, 1, 1], [], []>} : vector<8x128xbf16>, vector<128x128xbf16>, vector<8x128xf32> -> vector<8x128xf32>
    %30 = vector.broadcast %1 : vector<1x128xf32> to vector<8x128xf32>
    %31 = arith.addf %29, %30 : vector<8x128xf32>
    %32 = arith.addf %31, %19 : vector<8x128xf32>
    %cst_22 = arith.constant dense<0.000000e+00> : vector<8xf32>
    %33 = vector.multi_reduction <add>, %32, %cst_22 [1] : vector<8x128xf32> to vector<8xf32>
    %34 = vector.shape_cast %33 : vector<8xf32> to vector<8x1xf32>
    %cst_23 = arith.constant 3.125000e-02 : f32
    %35 = vector.broadcast %cst_23 : f32 to vector<8x1xf32>
    %36 = arith.mulf %34, %35 : vector<8x1xf32>
    %37 = vector.broadcast %36 : vector<8x1xf32> to vector<8x128xf32>
    %38 = arith.subf %32, %37 : vector<8x128xf32>
    %39 = vector.broadcast %13 : vector<1x128xf32> to vector<8x128xf32>
    %40 = arith.mulf %38, %39 : vector<8x128xf32>
    %41 = arith.mulf %40, %40 : vector<8x128xf32>
    %cst_24 = arith.constant dense<0.000000e+00> : vector<8xf32>
    %42 = vector.multi_reduction <add>, %41, %cst_24 [1] : vector<8x128xf32> to vector<8xf32>
    %43 = vector.shape_cast %42 : vector<8xf32> to vector<8x1xf32>
    %cst_25 = arith.constant 3.125000e-02 : f32
    %44 = vector.broadcast %cst_25 : f32 to vector<8x1xf32>
    %45 = arith.mulf %43, %44 : vector<8x1xf32>
    %cst_26 = arith.constant 9.99999974E-6 : f32
    %46 = vector.broadcast %cst_26 : f32 to vector<8x1xf32>
    %47 = arith.addf %45, %46 : vector<8x1xf32>
    %48 = math.rsqrt %47 : vector<8x1xf32>
    %49 = vector.broadcast %48 : vector<8x1xf32> to vector<8x128xf32>
    %50 = arith.mulf %40, %49 : vector<8x128xf32>
    %51 = vector.broadcast %2 : vector<1x128xf32> to vector<8x128xf32>
    %52 = arith.mulf %50, %51 : vector<8x128xf32>
    %53 = vector.broadcast %3 : vector<1x128xf32> to vector<8x128xf32>
    %54 = arith.addf %52, %53 : vector<8x128xf32>
    %55 = arith.truncf %54 : vector<8x128xf32> to vector<8x128xbf16>
    %c0_27 = arith.constant 0 : index
    %c0_28 = arith.constant 0 : index
    %56 = vector.load %arg5[%c0_27, %c0_28] : memref<128x128xbf16, #tpu.memory_space<vmem>>, vector<128x128xbf16>
    %cst_29 = arith.constant dense<0.000000e+00> : vector<8x128xf32>
    %57 = tpu.matmul %55, %56, %cst_29 {dimension_numbers = #tpu.dot_dimension_numbers<[1], [0], [0], [1], [0, 0, 1, 1], [], []>} : vector<8x128xbf16>, vector<128x128xbf16>, vector<8x128xf32> -> vector<8x128xf32>
    %58 = vector.broadcast %8 : vector<1x128xf32> to vector<8x128xf32>
    %59 = arith.addf %57, %58 : vector<8x128xf32>
    %cst_30 = arith.constant 0.000000e+00 : f32
    %60 = vector.broadcast %cst_30 : f32 to vector<8x128xf32>
    %61 = arith.maximumf %59, %60 : vector<8x128xf32>
    %62 = arith.truncf %61 : vector<8x128xf32> to vector<8x128xbf16>
    %c0_31 = arith.constant 0 : index
    %c0_32 = arith.constant 0 : index
    %63 = vector.load %arg6[%c0_31, %c0_32] : memref<128x128xbf16, #tpu.memory_space<vmem>>, vector<128x128xbf16>
    %cst_33 = arith.constant dense<0.000000e+00> : vector<8x128xf32>
    %64 = tpu.matmul %62, %63, %cst_33 {dimension_numbers = #tpu.dot_dimension_numbers<[1], [0], [0], [1], [0, 0, 1, 1], [], []>} : vector<8x128xbf16>, vector<128x128xbf16>, vector<8x128xf32> -> vector<8x128xf32>
    %65 = vector.broadcast %4 : vector<1x128xf32> to vector<8x128xf32>
    %66 = arith.addf %64, %65 : vector<8x128xf32>
    %67 = arith.addf %66, %54 : vector<8x128xf32>
    %cst_34 = arith.constant dense<0.000000e+00> : vector<8xf32>
    %68 = vector.multi_reduction <add>, %67, %cst_34 [1] : vector<8x128xf32> to vector<8xf32>
    %69 = vector.shape_cast %68 : vector<8xf32> to vector<8x1xf32>
    %cst_35 = arith.constant 3.125000e-02 : f32
    %70 = vector.broadcast %cst_35 : f32 to vector<8x1xf32>
    %71 = arith.mulf %69, %70 : vector<8x1xf32>
    %72 = vector.broadcast %71 : vector<8x1xf32> to vector<8x128xf32>
    %73 = arith.subf %67, %72 : vector<8x128xf32>
    %74 = vector.broadcast %13 : vector<1x128xf32> to vector<8x128xf32>
    %75 = arith.mulf %73, %74 : vector<8x128xf32>
    %76 = arith.mulf %75, %75 : vector<8x128xf32>
    %cst_36 = arith.constant dense<0.000000e+00> : vector<8xf32>
    %77 = vector.multi_reduction <add>, %76, %cst_36 [1] : vector<8x128xf32> to vector<8xf32>
    %78 = vector.shape_cast %77 : vector<8xf32> to vector<8x1xf32>
    %cst_37 = arith.constant 3.125000e-02 : f32
    %79 = vector.broadcast %cst_37 : f32 to vector<8x1xf32>
    %80 = arith.mulf %78, %79 : vector<8x1xf32>
    %cst_38 = arith.constant 9.99999974E-6 : f32
    %81 = vector.broadcast %cst_38 : f32 to vector<8x1xf32>
    %82 = arith.addf %80, %81 : vector<8x1xf32>
    %83 = math.rsqrt %82 : vector<8x1xf32>
    %84 = vector.broadcast %83 : vector<8x1xf32> to vector<8x128xf32>
    %85 = arith.mulf %75, %84 : vector<8x128xf32>
    %86 = vector.broadcast %5 : vector<1x128xf32> to vector<8x128xf32>
    %87 = arith.mulf %85, %86 : vector<8x128xf32>
    %88 = vector.broadcast %6 : vector<1x128xf32> to vector<8x128xf32>
    %89 = arith.addf %87, %88 : vector<8x128xf32>
    %c0_39 = arith.constant 0 : index
    %c0_40 = arith.constant 0 : index
    %90 = vector.load %arg9[%c0_39, %c0_40] : memref<8x128xf32, #tpu.memory_space<vmem>>, vector<8x128xf32>
    tpu.vector_store %arg9[%c0_39, %c0_40], %89 {strides = array<i32>} : memref<8x128xf32, #tpu.memory_space<vmem>>, vector<8x128xf32>,
    return
  }
  func.func @transform_0(%arg0: i32) -> (i32, i32) {
    %c0_i32 = arith.constant 0 : i32
    %c0_i32_0 = arith.constant 0 : i32
    return %arg0, %c0_i32 : i32, i32
  }
  func.func @transform_1(%arg0: i32) -> (i32, i32) {
    %c0_i32 = arith.constant 0 : i32
    %c0_i32_0 = arith.constant 0 : i32
    %c0_i32_1 = arith.constant 0 : i32
    return %c0_i32, %c0_i32_0 : i32, i32
  }
  func.func @transform_2(%arg0: i32) -> (i32, i32) {
    %c0_i32 = arith.constant 0 : i32
    %c0_i32_0 = arith.constant 0 : i32
    %c0_i32_1 = arith.constant 0 : i32
    return %c0_i32, %c0_i32_0 : i32, i32
  }
  func.func @transform_3(%arg0: i32) -> (i32, i32) {
    %c0_i32 = arith.constant 0 : i32
    %c0_i32_0 = arith.constant 0 : i32
    %c0_i32_1 = arith.constant 0 : i32
    return %c0_i32, %c0_i32_0 : i32, i32
  }
  func.func @transform_4(%arg0: i32) -> (i32, i32) {
    %c0_i32 = arith.constant 0 : i32
    %c0_i32_0 = arith.constant 0 : i32
    %c0_i32_1 = arith.constant 0 : i32
    return %c0_i32, %c0_i32_0 : i32, i32
  }
  func.func @transform_5(%arg0: i32) -> (i32, i32) {
    %c0_i32 = arith.constant 0 : i32
    %c0_i32_0 = arith.constant 0 : i32
    %c0_i32_1 = arith.constant 0 : i32
    return %c0_i32, %c0_i32_0 : i32, i32
  }
  func.func @transform_6(%arg0: i32) -> (i32, i32) {
    %c0_i32 = arith.constant 0 : i32
    %c0_i32_0 = arith.constant 0 : i32
    %c0_i32_1 = arith.constant 0 : i32
    return %c0_i32, %c0_i32_0 : i32, i32
  }
  func.func @transform_7(%arg0: i32) -> (i32, i32) {
    %c0_i32 = arith.constant 0 : i32
    %c0_i32_0 = arith.constant 0 : i32
    %c0_i32_1 = arith.constant 0 : i32
    return %c0_i32, %c0_i32_0 : i32, i32
  }
  func.func @transform_8(%arg0: i32) -> (i32, i32) {
    %c0_i32 = arith.constant 0 : i32
    %c0_i32_0 = arith.constant 0 : i32
    return %arg0, %c0_i32 : i32, i32
  }
}

</mosaic_0001>

<llo_original>
// kernel: tpu_custom_call.1
$region0: #{tpu_custom_call.1}
  #allocation0 [shape = 'u32[]', space=smem, size = 0x4, offset = 0x4, fixed_abs, tag = 'smem constant byte address 0x4 - core index']
  #allocation1 [shape = 'u32[144,128]{1,0:T(1,128)}', space=vmem, size = 0x12000, scoped, tag = 'internal scratch']
  %s0 = inlined_call_operand.hbm [shape: f32[16,128], index: 0, kind: input, shape index: {}]
  %s1 = inlined_call_operand.hbm [shape: bf16[128,128], index: 1, kind: input, shape index: {}]
  %s2 = inlined_call_operand.hbm [shape: bf16[128,128], index: 2, kind: input, shape index: {}]
  %s3 = inlined_call_operand.hbm [shape: bf16[128,128], index: 3, kind: input, shape index: {}]
  %s4 = inlined_call_operand.hbm [shape: bf16[128,128], index: 4, kind: input, shape index: {}]
  %s5 = inlined_call_operand.hbm [shape: bf16[128,128], index: 5, kind: input, shape index: {}]
  %s6 = inlined_call_operand.vmem [shape: f32[8,128], index: 6, kind: input, shape index: {}]
  %s7 = inlined_call_operand.vmem [shape: f32[8,128], index: 7, kind: input, shape index: {}]
  %s8 = inlined_call_operand.hbm [shape: f32[16,128], index: 8, kind: output, shape index: {}]
  %s9 = sld [smem:[#allocation0]]
  $region89: #{tpu_custom_call.1} parent=0
    _
  %s11 = ssub.s32 1, %s9
  %s12 = scalar_select 0, %s11, %s9
  $region1: #{tpu_custom_call.1} parent=0
    #allocation2 [shape = 'u8[8192]{0}', space=vmem, size = 0x2000, scoped, tag = 'input window, operand 0']
    #allocation3 [shape = 's32[2]{0}', space=sflag, size = 0x8, scoped, tag = 'scoped memory for tpu_custom_call.1']
    #allocation4 [shape = 's32[2]{0}', space=sflag, size = 0x8, scoped, tag = 'scoped memory for tpu_custom_call.1']
    #allocation5 [shape = 'u8[32768]{0}', space=vmem, size = 0x8000, scoped, tag = 'input window, operand 1, single buffered']
    #allocation6 [shape = 's32[1]{0}', space=sflag, size = 0x4, scoped, tag = 'scoped memory for tpu_custom_call.1']
    #allocation7 [shape = 'u8[32768]{0}', space=vmem, size = 0x8000, scoped, tag = 'input window, operand 2, single buffered']
    #allocation8 [shape = 'u8[32768]{0}', space=vmem, size = 0x8000, scoped, tag = 'input window, operand 3, single buffered']
    #allocation9 [shape = 's32[1]{0}', space=sflag, size = 0x4, scoped, tag = 'scoped memory for tpu_custom_call.1']
    #allocation10 [shape = 'u8[32768]{0}', space=vmem, size = 0x8000, scoped, tag = 'input window, operand 4, single buffered']
    #allocation11 [shape = 'u8[32768]{0}', space=vmem, size = 0x8000, scoped, tag = 'input window, operand 5, single buffered']
    #allocation12 [shape = 's32[1]{0}', space=sflag, size = 0x4, scoped, tag = 'scoped memory for tpu_custom_call.1']
    #allocation13 [shape = 'u8[8192]{0}', space=vmem, size = 0x2000, scoped, tag = 'output window, operand 0']
    %13 = vsyncpa [#allocation3], 0
    %s14 = scalar_lea.sflag [#allocation3], 1
    %15 = vsyncpa %s14, 0
    %16 = vsyncpa [#allocation6], 0
    %17 = vsyncpa [#allocation9], 0
    %18 = vsyncpa [#allocation12], 0
    %19 = vsyncpa [#allocation4], 0
    %s20 = scalar_lea.sflag [#allocation4], 1
    %21 = vsyncpa %s20, 0
    loop: start=0, step=1, limit=4
    $region2: #{tpu_custom_call.1} parent=1 // loop_pre_header
      _
    $region3: #{tpu_custom_call.1} parent=1 // loop_header
      %s23 = sphi 0, %s27
      %p24 = scmp.ge.s32.totalorder %s23, 4
      %s33 = sphi 0, %s35
      %s36 = sphi 0, %s33
      %s37 = sphi 0, %s36
      %s53 = sphi 0, %s37
      %s57 = sphi 0, %s57
      %s59 = sphi 0, %s57
      %s60 = sphi 0, %s59
      %s74 = sphi 0, %s60
      %s78 = sphi 0, %s78
      %s80 = sphi 0, %s78
      %s81 = sphi 0, %s80
      %s95 = sphi 0, %s81
      %s99 = sphi 0, %s99
      %s101 = sphi 0, %s99
      %s102 = sphi 0, %s101
      %s116 = sphi 0, %s102
      %s120 = sphi 0, %s120
      %s122 = sphi 0, %s120
      %s123 = sphi 0, %s122
      %s137 = sphi 0, %s123
      %s141 = sphi 0, %s141
      %s143 = sphi 0, %s141
      %s144 = sphi 0, %s143
      %s158 = sphi 0, %s144
      %s162 = sphi 0, %s162
      %s164 = sphi 0, %s162
      %s165 = sphi 0, %s164
      %s179 = sphi 0, %s165
      %s183 = sphi 0, %s183
      %s185 = sphi 0, %s183
      %s186 = sphi 0, %s185
      %s200 = sphi 0, %s186
      %s206 = sphi 0, %s208
      %s209 = sphi 0, %s206
      %s210 = sphi 0, %s209
      %s226 = sphi 0, %s210
    $region4: #{tpu_custom_call.1} parent=1 // loop_header_branch
      %26 = sbr.rel (%p24) target = $region8
    $region5: #{tpu_custom_call.1} parent=1 // loop_body
      %s28 = ssub.s32 %s23, 1
      %s29 = ssub.s32 %s23, 2
      %s30 = sadd.s32 %s23, 1
      %s31 = ssub.s32 %s23, %s30
      %p32 = scmp.eq.s32.totalorder %s31, 0
      %s34 = sadd.s32 %s33, 1
      %s35 = scalar_select %p32, %s33, %s34
      %p38 = pneg %p32
      %p39 = scmp.eq.s32.totalorder %s23, 1
      %p40 = por %p38, %p39
      %p41 = scmp.ne.s32.totalorder %s33, %s36
      %p42 = scmp.eq.s32.totalorder %s23, 0
      %p43 = por %p41, %p42
      %p44 = scmp.ne.s32.totalorder %s33, %s36
      %p45 = scmp.eq.s32.totalorder %s28, 1
      %p46 = por %p44, %p45
      %p47 = scmp.ne.s32.totalorder %s36, %s37
      %p48 = scmp.eq.s32.totalorder %s28, 0
      %p49 = por %p47, %p48
      %p50 = scmp.ne.s32.totalorder %s36, %s37
      %p51 = scmp.eq.s32.totalorder %s29, 1
      %p52 = por %p50, %p51
      %p54 = scmp.ne.s32.totalorder %s37, %s53
      %p55 = scmp.eq.s32.totalorder %s29, 0
      %p56 = por %p54, %p55
      %s58 = sadd.s32 %s57, 1
      %p61 = scmp.eq.s32.totalorder %s23, 1
      %p62 = scmp.ne.s32.totalorder %s57, %s59
      %p63 = scmp.eq.s32.totalorder %s23, 0
      %p64 = por %p62, %p63
      %p65 = scmp.ne.s32.totalorder %s57, %s59
      %p66 = scmp.eq.s32.totalorder %s28, 1
      %p67 = por %p65, %p66
      %p68 = scmp.ne.s32.totalorder %s59, %s60
      %p69 = scmp.eq.s32.totalorder %s28, 0
      %p70 = por %p68, %p69
      %p71 = scmp.ne.s32.totalorder %s59, %s60
      %p72 = scmp.eq.s32.totalorder %s29, 1
      %p73 = por %p71, %p72
      %p75 = scmp.ne.s32.totalorder %s60, %s74
      %p76 = scmp.eq.s32.totalorder %s29, 0
      %p77 = por %p75, %p76
      %s79 = sadd.s32 %s78, 1
      %p82 = scmp.eq.s32.totalorder %s23, 1
      %p83 = scmp.ne.s32.totalorder %s78, %s80
      %p84 = scmp.eq.s32.totalorder %s23, 0
      %p85 = por %p83, %p84
      %p86 = scmp.ne.s32.totalorder %s78, %s80
      %p87 = scmp.eq.s32.totalorder %s28, 1
      %p88 = por %p86, %p87
      %p89 = scmp.ne.s32.totalorder %s80, %s81
      %p90 = scmp.eq.s32.totalorder %s28, 0
      %p91 = por %p89, %p90
      %p92 = scmp.ne.s32.totalorder %s80, %s81
      %p93 = scmp.eq.s32.totalorder %s29, 1
      %p94 = por %p92, %p93
      %p96 = scmp.ne.s32.totalorder %s81, %s95
      %p97 = scmp.eq.s32.totalorder %s29, 0
      %p98 = por %p96, %p97
      %s100 = sadd.s32 %s99, 1
      %p103 = scmp.eq.s32.totalorder %s23, 1
      %p104 = scmp.ne.s32.totalorder %s99, %s101
      %p105 = scmp.eq.s32.totalorder %s23, 0
      %p106 = por %p104, %p105
      %p107 = scmp.ne.s32.totalorder %s99, %s101
      %p108 = scmp.eq.s32.totalorder %s28, 1
      %p109 = por %p107, %p108
      %p110 = scmp.ne.s32.totalorder %s101, %s102
      %p111 = scmp.eq.s32.totalorder %s28, 0
      %p112 = por %p110, %p111
      %p113 = scmp.ne.s32.totalorder %s101, %s102
      %p114 = scmp.eq.s32.totalorder %s29, 1
      %p115 = por %p113, %p114
      %p117 = scmp.ne.s32.totalorder %s102, %s116
      %p118 = scmp.eq.s32.totalorder %s29, 0
      %p119 = por %p117, %p118
      %s121 = sadd.s32 %s120, 1
      %p124 = scmp.eq.s32.totalorder %s23, 1
      %p125 = scmp.ne.s32.totalorder %s120, %s122
      %p126 = scmp.eq.s32.totalorder %s23, 0
      %p127 = por %p125, %p126
      %p128 = scmp.ne.s32.totalorder %s120, %s122
      %p129 = scmp.eq.s32.totalorder %s28, 1
      %p130 = por %p128, %p129
      %p131 = scmp.ne.s32.totalorder %s122, %s123
      %p132 = scmp.eq.s32.totalorder %s28, 0
      %p133 = por %p131, %p132
      %p134 = scmp.ne.s32.totalorder %s122, %s123
      %p135 = scmp.eq.s32.totalorder %s29, 1
      %p136 = por %p134, %p135
      %p138 = scmp.ne.s32.totalorder %s123, %s137
      %p139 = scmp.eq.s32.totalorder %s29, 0
      %p140 = por %p138, %p139
      %s142 = sadd.s32 %s141, 1
      %p145 = scmp.eq.s32.totalorder %s23, 1
      %p146 = scmp.ne.s32.totalorder %s141, %s143
      %p147 = scmp.eq.s32.totalorder %s23, 0
      %p148 = por %p146, %p147
      %p149 = scmp.ne.s32.totalorder %s141, %s143
      %p150 = scmp.eq.s32.totalorder %s28, 1
      %p151 = por %p149, %p150
      %p152 = scmp.ne.s32.totalorder %s143, %s144
      %p153 = scmp.eq.s32.totalorder %s28, 0
      %p154 = por %p152, %p153
      %p155 = scmp.ne.s32.totalorder %s143, %s144
      %p156 = scmp.eq.s32.totalorder %s29, 1
      %p157 = por %p155, %p156
      %p159 = scmp.ne.s32.totalorder %s144, %s158
      %p160 = scmp.eq.s32.totalorder %s29, 0
      %p161 = por %p159, %p160
      %s163 = sadd.s32 %s162, 1
      %p166 = scmp.eq.s32.totalorder %s23, 1
      %p167 = scmp.ne.s32.totalorder %s162, %s164
      %p168 = scmp.eq.s32.totalorder %s23, 0
      %p169 = por %p167, %p168
      %p170 = scmp.ne.s32.totalorder %s162, %s164
      %p171 = scmp.eq.s32.totalorder %s28, 1
      %p172 = por %p170, %p171
      %p173 = scmp.ne.s32.totalorder %s164, %s165
      %p174 = scmp.eq.s32.totalorder %s28, 0
      %p175 = por %p173, %p174
      %p176 = scmp.ne.s32.totalorder %s164, %s165
      %p177 = scmp.eq.s32.totalorder %s29, 1
      %p178 = por %p176, %p177
      %p180 = scmp.ne.s32.totalorder %s165, %s179
      %p181 = scmp.eq.s32.totalorder %s29, 0
      %p182 = por %p180, %p181
      %s184 = sadd.s32 %s183, 1
      %p187 = scmp.eq.s32.totalorder %s23, 1
      %p188 = scmp.ne.s32.totalorder %s183, %s185
      %p189 = scmp.eq.s32.totalorder %s23, 0
      %p190 = por %p188, %p189
      %p191 = scmp.ne.s32.totalorder %s183, %s185
      %p192 = scmp.eq.s32.totalorder %s28, 1
      %p193 = por %p191, %p192
      %p194 = scmp.ne.s32.totalorder %s185, %s186
      %p195 = scmp.eq.s32.totalorder %s28, 0
      %p196 = por %p194, %p195
      %p197 = scmp.ne.s32.totalorder %s185, %s186
      %p198 = scmp.eq.s32.totalorder %s29, 1
      %p199 = por %p197, %p198
      %p201 = scmp.ne.s32.totalorder %s186, %s200
      %p202 = scmp.eq.s32.totalorder %s29, 0
      %p203 = por %p201, %p202
      %s204 = ssub.s32 %s23, %s30
      %p205 = scmp.eq.s32.totalorder %s204, 0
      %s207 = sadd.s32 %s206, 1
      %s208 = scalar_select %p205, %s206, %s207
      %p211 = pneg %p205
      %p212 = scmp.eq.s32.totalorder %s23, 1
      %p213 = por %p211, %p212
      %p214 = scmp.ne.s32.totalorder %s206, %s209
      %p215 = scmp.eq.s32.totalorder %s23, 0
      %p216 = por %p214, %p215
      %p217 = scmp.ne.s32.totalorder %s206, %s209
      %p218 = scmp.eq.s32.totalorder %s28, 1
      %p219 = por %p217, %p218
      %p220 = scmp.ne.s32.totalorder %s209, %s210
      %p221 = scmp.eq.s32.totalorder %s28, 0
      %p222 = por %p220, %p221
      %p223 = scmp.ne.s32.totalorder %s209, %s210
      %p224 = scmp.eq.s32.totalorder %s29, 1
      %p225 = por %p223, %p224
      %p227 = scmp.ne.s32.totalorder %s210, %s226
      %p228 = scmp.eq.s32.totalorder %s29, 0
      %p229 = por %p227, %p228
      %p230 = scmp.le.s32.totalorder 1, %s23
      %p231 = scmp.lt.s32.totalorder %s23, 3
      %p232 = pnand %p230, %p231
      %p233 = pneg %p232
      // Predicated region
      $region9: #{tpu_custom_call.1} parent=5 // pred_check
        _
      $region10: #{tpu_custom_call.1} parent=5 // pred_check_branch
        %235 = sbr.rel (%p232) target = $region12
      $region11: #{tpu_custom_call.1} parent=5 // pred_region
        %s236 = ssub.s32 %s23, 1
        // Predicated region
        $region13: #{tpu_custom_call.1} parent=11 // pred_check
          %p237 = pneg %p70
        $region14: #{tpu_custom_call.1} parent=11 // pred_check_branch
          %239 = sbr.rel (%p237) target = $region16
        $region15: #{tpu_custom_call.1} parent=11 // pred_region
          %s241 = ssub.s32 1024, 1024
          %242 = vsyncadd [#allocation6], %s241
          %s243 = sshll.u32 [#allocation5], 4
          %s244 = int_to_ptr.vmem [resolvable:$true] %s243
          %249 = dma.hbm_to_vmem [thread:$0]  %s1, 1024, %s244, [#allocation6], 64, 64, 4
        $region16: #{tpu_custom_call.1} parent=11 // pred_fallthru
          _
        // Predicated region
        $region17: #{tpu_custom_call.1} parent=11 // pred_check
          %p250 = pneg %p91
        $region18: #{tpu_custom_call.1} parent=11 // pred_check_branch
          %252 = sbr.rel (%p250) target = $region20
        $region19: #{tpu_custom_call.1} parent=11 // pred_region
          %s254 = ssub.s32 1024, 1024
          %255 = vsyncadd [#allocation6], %s254
          %s256 = sshll.u32 [#allocation7], 4
          %s257 = int_to_ptr.vmem [resolvable:$true] %s256
          %262 = dma.hbm_to_vmem [thread:$0]  %s2, 1024, %s257, [#allocation6], 64, 64, 4
        $region20: #{tpu_custom_call.1} parent=11 // pred_fallthru
          _
        // Predicated region
        $region21: #{tpu_custom_call.1} parent=11 // pred_check
          %p263 = pneg %p112
        $region22: #{tpu_custom_call.1} parent=11 // pred_check_branch
          %265 = sbr.rel (%p263) target = $region24
        $region23: #{tpu_custom_call.1} parent=11 // pred_region
          %s267 = ssub.s32 1024, 1024
          %268 = vsyncadd [#allocation9], %s267
          %s269 = sshll.u32 [#allocation8], 4
          %s270 = int_to_ptr.vmem [resolvable:$true] %s269
          %275 = dma.hbm_to_vmem [thread:$0]  %s3, 1024, %s270, [#allocation9], 64, 64, 4
        $region24: #{tpu_custom_call.1} parent=11 // pred_fallthru
          _
        // Predicated region
        $region25: #{tpu_custom_call.1} parent=11 // pred_check
          %p276 = pneg %p133
        $region26: #{tpu_custom_call.1} parent=11 // pred_check_branch
          %278 = sbr.rel (%p276) target = $region28
        $region27: #{tpu_custom_call.1} parent=11 // pred_region
          %s280 = ssub.s32 1024, 1024
          %281 = vsyncadd [#allocation9], %s280
          %s282 = sshll.u32 [#allocation10], 4
          %s283 = int_to_ptr.vmem [resolvable:$true] %s282
          %288 = dma.hbm_to_vmem [thread:$0]  %s4, 1024, %s283, [#allocation9], 64, 64, 4
        $region28: #{tpu_custom_call.1} parent=11 // pred_fallthru
          _
        // Predicated region
        $region29: #{tpu_custom_call.1} parent=11 // pred_check
          %p289 = pneg %p154
        $region30: #{tpu_custom_call.1} parent=11 // pred_check_branch
          %291 = sbr.rel (%p289) target = $region32
        $region31: #{tpu_custom_call.1} parent=11 // pred_region
          %s293 = ssub.s32 1024, 1024
          %294 = vsyncadd [#allocation12], %s293
          %s295 = sshll.u32 [#allocation11], 4
          %s296 = int_to_ptr.vmem [resolvable:$true] %s295
          %301 = dma.hbm_to_vmem [thread:$0]  %s5, 1024, %s296, [#allocation12], 64, 64, 4
        $region32: #{tpu_custom_call.1} parent=11 // pred_fallthru
          _
        // Predicated region
        $region33: #{tpu_custom_call.1} parent=11 // pred_check
          %p302 = pneg %p175
        $region34: #{tpu_custom_call.1} parent=11 // pred_check_branch
          %304 = sbr.rel (%p302) target = $region36
        $region35: #{tpu_custom_call.1} parent=11 // pred_region
          _
        $region36: #{tpu_custom_call.1} parent=11 // pred_fallthru
          _
        // Predicated region
        $region37: #{tpu_custom_call.1} parent=11 // pred_check
          %p305 = pneg %p196
        $region38: #{tpu_custom_call.1} parent=11 // pred_check_branch
          %307 = sbr.rel (%p305) target = $region40
        $region39: #{tpu_custom_call.1} parent=11 // pred_region
          _
        $region40: #{tpu_custom_call.1} parent=11 // pred_fallthru
          _
      $region12: #{tpu_custom_call.1} parent=5 // pred_fallthru
        _
      %p308 = scmp.lt.s32.totalorder %s23, 2
      // Predicated region
      $region41: #{tpu_custom_call.1} parent=5 // pred_check
        %p309 = pneg %p308
      $region42: #{tpu_custom_call.1} parent=5 // pred_check_branch
        %311 = sbr.rel (%p309) target = $region44
      $region43: #{tpu_custom_call.1} parent=5 // pred_region
        // Predicated region
        $region45: #{tpu_custom_call.1} parent=43 // pred_check
          %p312 = pneg %p43
        $region46: #{tpu_custom_call.1} parent=43 // pred_check_branch
          %314 = sbr.rel (%p312) target = $region48
        $region47: #{tpu_custom_call.1} parent=43 // pred_region
          %s315 = sand.u32 %s33, 1
          %s316 = scalar_lea.sflag [#allocation3], %s315
          %s317 = sand.u32 %s33, 1
          %s318 = smul.addr %s317, 8
          %s319 = scalar_lea.vmem [#allocation2], %s318
          %s321 = ssub.s32 128, 128
          %322 = vsyncadd %s316, %s321
          %s323 = smul.addr %s23, 128
          %s324 = scalar_lea.hbm %s0, %s323
          %s326 = sshll.u32 %s319, 4
          %s327 = int_to_ptr.vmem [resolvable:$true] %s326
          %329 = dma.hbm_to_vmem [thread:$0]  %s324, 128, %s327, %s316
        $region48: #{tpu_custom_call.1} parent=43 // pred_fallthru
          _
      $region44: #{tpu_custom_call.1} parent=5 // pred_fallthru
        _
      %p330 = scmp.le.s32.totalorder 1, %s23
      %p331 = scmp.lt.s32.totalorder %s23, 3
      %p332 = pnand %p330, %p331
      %p333 = pneg %p332
      // Predicated region
      $region49: #{tpu_custom_call.1} parent=5 // pred_check
        _
      $region50: #{tpu_custom_call.1} parent=5 // pred_check_branch
        %335 = sbr.rel (%p332) target = $region52
      $region51: #{tpu_custom_call.1} parent=5 // pred_region
        %s336 = ssub.s32 %s23, 1
        %s337 = sand.u32 %s36, 1
        %s338 = scalar_lea.sflag [#allocation3], %s337
        %s339 = sand.u32 %s36, 1
        %s340 = smul.addr %s339, 8
        %s341 = scalar_lea.vmem [#allocation2], %s340
        // Predicated region
        $region53: #{tpu_custom_call.1} parent=51 // pred_check
          %p342 = pneg %p49
        $region54: #{tpu_custom_call.1} parent=51 // pred_check_branch
          %344 = sbr.rel (%p342) target = $region56
        $region55: #{tpu_custom_call.1} parent=51 // pred_region
          %345 = dma.done %s338, 128
        $region56: #{tpu_custom_call.1} parent=51 // pred_fallthru
          _
        // Predicated region
        $region57: #{tpu_custom_call.1} parent=51 // pred_check
          %p346 = pneg %p70
        $region58: #{tpu_custom_call.1} parent=51 // pred_check_branch
          %348 = sbr.rel (%p346) target = $region60
        $region59: #{tpu_custom_call.1} parent=51 // pred_region
          %349 = dma.done [#allocation6], 1024
        $region60: #{tpu_custom_call.1} parent=51 // pred_fallthru
          _
        // Predicated region
        $region61: #{tpu_custom_call.1} parent=51 // pred_check
          %p350 = pneg %p91
        $region62: #{tpu_custom_call.1} parent=51 // pred_check_branch
          %352 = sbr.rel (%p350) target = $region64
        $region63: #{tpu_custom_call.1} parent=51 // pred_region
          %353 = dma.done [#allocation6], 1024
        $region64: #{tpu_custom_call.1} parent=51 // pred_fallthru
          _
        // Predicated region
        $region65: #{tpu_custom_call.1} parent=51 // pred_check
          %p354 = pneg %p112
        $region66: #{tpu_custom_call.1} parent=51 // pred_check_branch
          %356 = sbr.rel (%p354) target = $region68
        $region67: #{tpu_custom_call.1} parent=51 // pred_region
          %357 = dma.done [#allocation9], 1024
        $region68: #{tpu_custom_call.1} parent=51 // pred_fallthru
          _
        // Predicated region
        $region69: #{tpu_custom_call.1} parent=51 // pred_check
          %p358 = pneg %p133
        $region70: #{tpu_custom_call.1} parent=51 // pred_check_branch
          %360 = sbr.rel (%p358) target = $region72
        $region71: #{tpu_custom_call.1} parent=51 // pred_region
          %361 = dma.done [#allocation9], 1024
        $region72: #{tpu_custom_call.1} parent=51 // pred_fallthru
          _
        // Predicated region
        $region73: #{tpu_custom_call.1} parent=51 // pred_check
          %p362 = pneg %p154
        $region74: #{tpu_custom_call.1} parent=51 // pred_check_branch
          %364 = sbr.rel (%p362) target = $region76
        $region75: #{tpu_custom_call.1} parent=51 // pred_region
          %365 = dma.done [#allocation12], 1024
        $region76: #{tpu_custom_call.1} parent=51 // pred_fallthru
          _
        %s366 = sand.u32 %s36, 1
        %s367 = scalar_lea.sflag [#allocation3], %s366
        %s368 = sand.u32 %s36, 1
        %s369 = smul.addr %s368, 8
        %s370 = scalar_lea.vmem [#allocation2], %s369
        %p371 = pneg %p49
        %p372 = pneg %p46
        %p373 = pneg %p70
        %p374 = pneg %p67
        %p375 = pneg %p91
        %p376 = pneg %p88
        %p377 = pneg %p112
        %p378 = pneg %p109
        %p379 = pneg %p133
        %p380 = pneg %p130
        %p381 = pneg %p154
        %p382 = pneg %p151
        %p383 = pneg %p175
        %p384 = pneg %p172
        %p385 = pneg %p196
        %p386 = pneg %p193
        %p387 = pneg %p222
        %p388 = pneg %p219
        %s389 = sand.u32 %s209, 1
        %s390 = scalar_lea.sflag [#allocation4], %s389
        %s391 = sand.u32 %s209, 1
        %s392 = smul.addr %s391, 8
        %s393 = scalar_lea.vmem [#allocation13], %s392
        %v395 = vld [vmem:[%s6] sm:$0x1]
        %v396 = vld [vmem:[%s6 + $0x1] sm:$0x1]
        %v397 = vld [vmem:[%s6 + $0x2] sm:$0x1]
        %v398 = vld [vmem:[%s6 + $0x3] sm:$0x1]
        %v399 = vld [vmem:[%s6 + $0x4] sm:$0x1]
        %v400 = vld [vmem:[%s6 + $0x5] sm:$0x1]
        %v401 = vld [vmem:[%s6 + $0x6] sm:$0x1]
        %v402 = vld [vmem:[%s7] sm:$0x1]
        %v403 = vld [vmem:[%s7 + $0x1] sm:$0x1]
        %v404 = vlaneseq
        %v405 = vand.u32 %v404, 127
        %vm406 = vcmp.lt.s32.totalorder %v405, 32
        %v407 = vsel %vm406, 1, 0
        %v408 = vcvt.s32.f32 %v407
        %v409 = vld [vmem:[%s341] sm:$0xff]
        %v410 = vpack.c.bf16 %v409, %v409
        %v411 = vld [vmem:[#allocation5] sm:$0xf]
        %v412 = vld [vmem:[#allocation5 + $0x4] sm:$0xf]
        %v413 = vld [vmem:[#allocation5 + $0x8] sm:$0xf]
        %v414 = vld [vmem:[#allocation5 + $0xc] sm:$0xf]
        %v415 = vld [vmem:[#allocation5 + $0x10] sm:$0xf]
        %v416 = vld [vmem:[#allocation5 + $0x14] sm:$0xf]
        %v417 = vld [vmem:[#allocation5 + $0x18] sm:$0xf]
        %v418 = vld [vmem:[#allocation5 + $0x1c] sm:$0xf]
        %v419 = vld [vmem:[#allocation5 + $0x20] sm:$0xf]
        %v420 = vld [vmem:[#allocation5 + $0x24] sm:$0xf]
        %v421 = vld [vmem:[#allocation5 + $0x28] sm:$0xf]
        %v422 = vld [vmem:[#allocation5 + $0x2c] sm:$0xf]
        %v423 = vld [vmem:[#allocation5 + $0x30] sm:$0xf]
        %v424 = vld [vmem:[#allocation5 + $0x34] sm:$0xf]
        %v425 = vld [vmem:[#allocation5 + $0x38] sm:$0xf]
        %v426 = vld [vmem:[#allocation5 + $0x3c] sm:$0xf]
        %v427 = vlaneseq
        %v428 = vshrl.u32 %v427, 7
        %v429 = vsub.s32 0, %v428
        %v430 = vrot.slane %v395, %v429
        %v447 = vunpack.c.l.b16 %v411
        %v448 = vunpack.c.l.b16 %v412
        %v449 = vunpack.c.l.b16 %v413
        %v450 = vunpack.c.l.b16 %v414
        %v451 = vunpack.c.l.b16 %v415
        %v452 = vunpack.c.l.b16 %v416
        %v453 = vunpack.c.l.b16 %v417
        %v454 = vunpack.c.l.b16 %v418
        %v455 = vunpack.c.l.b16 %v419
        %v456 = vunpack.c.l.b16 %v420
        %v457 = vunpack.c.l.b16 %v421
        %v458 = vunpack.c.l.b16 %v422
        %v459 = vunpack.c.l.b16 %v423
        %v460 = vunpack.c.l.b16 %v424
        %v461 = vunpack.c.l.b16 %v425
        %v462 = vunpack.c.l.b16 %v426
        %v463 = vpack.c.b16 %v448, %v447
        %v464 = vpack.c.b16 %v450, %v449
        %v465 = vpack.c.b16 %v452, %v451
        %v466 = vpack.c.b16 %v454, %v453
        %v467 = vpack.c.b16 %v456, %v455
        %v468 = vpack.c.b16 %v458, %v457
        %v469 = vpack.c.b16 %v460, %v459
        %v470 = vpack.c.b16 %v462, %v461
        %479 = vmatprep.subr.bf16.mxu0 0
        %480 = vmatpush1.bf16.msra.mxu0 %v463
        %481 = vmatprep.subr.bf16.mxu0 0
        %482 = vmatpush1.bf16.msra.mxu0 %v464
        %483 = vmatprep.subr.bf16.mxu0 0
        %484 = vmatpush1.bf16.msra.mxu0 %v465
        %485 = vmatprep.subr.bf16.mxu0 0
        %486 = vmatpush1.bf16.msra.mxu0 %v466
        %487 = vmatprep.subr.bf16.mxu0 0
        %488 = vmatpush1.bf16.msra.mxu0 %v467
        %489 = vmatprep.subr.bf16.mxu0 0
        %490 = vmatpush1.bf16.msra.mxu0 %v468
        %491 = vmatprep.subr.bf16.mxu0 0
        %492 = vmatpush1.bf16.msra.mxu0 %v469
        %493 = vmatprep.subr.bf16.mxu0 0
        %494 = vmatpush1.bf16.msra.mxu0 %v470
        %495 = vmatprep.subr.bf16.mxu0 0
        %496 = vmatpush1.bf16.msra.mxu0 0
        %497 = vmatprep.subr.bf16.mxu0 0
        %498 = vmatpush1.bf16.msra.mxu0 0
        %499 = vmatprep.subr.bf16.mxu0 0
        %500 = vmatpush1.bf16.msra.mxu0 0
        %501 = vmatprep.subr.bf16.mxu0 0
        %502 = vmatpush1.bf16.msra.mxu0 0
        %503 = vmatprep.subr.bf16.mxu0 0
        %504 = vmatpush1.bf16.msra.mxu0 0
        %505 = vmatprep.subr.bf16.mxu0 0
        %506 = vmatpush1.bf16.msra.mxu0 0
        %507 = vmatprep.subr.bf16.mxu0 0
        %508 = vmatpush1.bf16.msra.mxu0 0
        %509 = vmatprep.subr.bf16.mxu0 0
        %510 = vmatpush1.bf16.msra.mxu0 0
        %511 = vmatprep.mubr.bf16.mxu0 0
        %512 = vmatmul.mubr.bf16.gmra.mrb[0].mxu0 %v410
        %v513 = vpop.f32.mrb[0].mxu0
        %v514 = vadd.f32 %v430, %v513
        %v515 = vpop.f32.mrb[0].mxu0
        %v516 = vpop.f32.mrb[0].mxu0
        %v517 = vpop.f32.mrb[0].mxu0
        %518 = vdwg.mxu0
        %v519 = vpack.c.bf16 %v514, %v514
        %v520 = vld [vmem:[#allocation7] sm:$0xf]
        %v521 = vld [vmem:[#allocation7 + $0x4] sm:$0xf]
        %v522 = vld [vmem:[#allocation7 + $0x8] sm:$0xf]
        %v523 = vld [vmem:[#allocation7 + $0xc] sm:$0xf]
        %v524 = vld [vmem:[#allocation7 + $0x10] sm:$0xf]
        %v525 = vld [vmem:[#allocation7 + $0x14] sm:$0xf]
        %v526 = vld [vmem:[#allocation7 + $0x18] sm:$0xf]
        %v527 = vld [vmem:[#allocation7 + $0x1c] sm:$0xf]
        %v528 = vld [vmem:[#allocation7 + $0x20] sm:$0xf]
        %v529 = vld [vmem:[#allocation7 + $0x24] sm:$0xf]
        %v530 = vld [vmem:[#allocation7 + $0x28] sm:$0xf]
        %v531 = vld [vmem:[#allocation7 + $0x2c] sm:$0xf]
        %v532 = vld [vmem:[#allocation7 + $0x30] sm:$0xf]
        %v533 = vld [vmem:[#allocation7 + $0x34] sm:$0xf]
        %v534 = vld [vmem:[#allocation7 + $0x38] sm:$0xf]
        %v535 = vld [vmem:[#allocation7 + $0x3c] sm:$0xf]
        %v536 = vlaneseq
        %v537 = vshrl.u32 %v536, 7
        %v538 = vsub.s32 0, %v537
        %v539 = vrot.slane %v402, %v538
        %v556 = vunpack.c.l.b16 %v520
        %v557 = vunpack.c.l.b16 %v521
        %v558 = vunpack.c.l.b16 %v522
        %v559 = vunpack.c.l.b16 %v523
        %v560 = vunpack.c.l.b16 %v524
        %v561 = vunpack.c.l.b16 %v525
        %v562 = vunpack.c.l.b16 %v526
        %v563 = vunpack.c.l.b16 %v527
        %v564 = vunpack.c.l.b16 %v528
        %v565 = vunpack.c.l.b16 %v529
        %v566 = vunpack.c.l.b16 %v530
        %v567 = vunpack.c.l.b16 %v531
        %v568 = vunpack.c.l.b16 %v532
        %v569 = vunpack.c.l.b16 %v533
        %v570 = vunpack.c.l.b16 %v534
        %v571 = vunpack.c.l.b16 %v535
        %v572 = vpack.c.b16 %v557, %v556
        %v573 = vpack.c.b16 %v559, %v558
        %v574 = vpack.c.b16 %v561, %v560
        %v575 = vpack.c.b16 %v563, %v562
        %v576 = vpack.c.b16 %v565, %v564
        %v577 = vpack.c.b16 %v567, %v566
        %v578 = vpack.c.b16 %v569, %v568
        %v579 = vpack.c.b16 %v571, %v570
        %588 = vmatprep.subr.bf16.mxu0 0
        %589 = vmatpush1.bf16.msra.mxu0 %v572
        %590 = vmatprep.subr.bf16.mxu0 0
        %591 = vmatpush1.bf16.msra.mxu0 %v573
        %592 = vmatprep.subr.bf16.mxu0 0
        %593 = vmatpush1.bf16.msra.mxu0 %v574
        %594 = vmatprep.subr.bf16.mxu0 0
        %595 = vmatpush1.bf16.msra.mxu0 %v575
        %596 = vmatprep.subr.bf16.mxu0 0
        %597 = vmatpush1.bf16.msra.mxu0 %v576
        %598 = vmatprep.subr.bf16.mxu0 0
        %599 = vmatpush1.bf16.msra.mxu0 %v577
        %600 = vmatprep.subr.bf16.mxu0 0
        %601 = vmatpush1.bf16.msra.mxu0 %v578
        %602 = vmatprep.subr.bf16.mxu0 0
        %603 = vmatpush1.bf16.msra.mxu0 %v579
        %604 = vmatprep.subr.bf16.mxu0 0
        %605 = vmatpush1.bf16.msra.mxu0 0
        %606 = vmatprep.subr.bf16.mxu0 0
        %607 = vmatpush1.bf16.msra.mxu0 0
        %608 = vmatprep.subr.bf16.mxu0 0
        %609 = vmatpush1.bf16.msra.mxu0 0
        %610 = vmatprep.subr.bf16.mxu0 0
        %611 = vmatpush1.bf16.msra.mxu0 0
        %612 = vmatprep.subr.bf16.mxu0 0
        %613 = vmatpush1.bf16.msra.mxu0 0
        %614 = vmatprep.subr.bf16.mxu0 0
        %615 = vmatpush1.bf16.msra.mxu0 0
        %616 = vmatprep.subr.bf16.mxu0 0
        %617 = vmatpush1.bf16.msra.mxu0 0
        %618 = vmatprep.subr.bf16.mxu0 0
        %619 = vmatpush1.bf16.msra.mxu0 0
        %620 = vmatprep.mubr.bf16.mxu0 0
        %621 = vmatmul.mubr.bf16.gmra.mrb[0].mxu0 %v519
        %v622 = vpop.f32.mrb[0].mxu0
        %v623 = vadd.f32 %v539, %v622
        %v624 = vpop.f32.mrb[0].mxu0
        %v625 = vpop.f32.mrb[0].mxu0
        %v626 = vpop.f32.mrb[0].mxu0
        %627 = vdwg.mxu0
        %v628 = vmax.f32 %v623, 0.0
        %v629 = vpack.c.bf16 %v628, %v628
        %v630 = vld [vmem:[#allocation8] sm:$0xf]
        %v631 = vld [vmem:[#allocation8 + $0x4] sm:$0xf]
        %v632 = vld [vmem:[#allocation8 + $0x8] sm:$0xf]
        %v633 = vld [vmem:[#allocation8 + $0xc] sm:$0xf]
        %v634 = vld [vmem:[#allocation8 + $0x10] sm:$0xf]
        %v635 = vld [vmem:[#allocation8 + $0x14] sm:$0xf]
        %v636 = vld [vmem:[#allocation8 + $0x18] sm:$0xf]
        %v637 = vld [vmem:[#allocation8 + $0x1c] sm:$0xf]
        %v638 = vld [vmem:[#allocation8 + $0x20] sm:$0xf]
        %v639 = vld [vmem:[#allocation8 + $0x24] sm:$0xf]
        %v640 = vld [vmem:[#allocation8 + $0x28] sm:$0xf]
        %v641 = vld [vmem:[#allocation8 + $0x2c] sm:$0xf]
        %v642 = vld [vmem:[#allocation8 + $0x30] sm:$0xf]
        %v643 = vld [vmem:[#allocation8 + $0x34] sm:$0xf]
        %v644 = vld [vmem:[#allocation8 + $0x38] sm:$0xf]
        %v645 = vld [vmem:[#allocation8 + $0x3c] sm:$0xf]
        %v646 = vlaneseq
        %v647 = vshrl.u32 %v646, 7
        %v648 = vsub.s32 0, %v647
        %v649 = vrot.slane %v396, %v648
        %v666 = vunpack.c.l.b16 %v630
        %v667 = vunpack.c.l.b16 %v631
        %v668 = vunpack.c.l.b16 %v632
        %v669 = vunpack.c.l.b16 %v633
        %v670 = vunpack.c.l.b16 %v634
        %v671 = vunpack.c.l.b16 %v635
        %v672 = vunpack.c.l.b16 %v636
        %v673 = vunpack.c.l.b16 %v637
        %v674 = vunpack.c.l.b16 %v638
        %v675 = vunpack.c.l.b16 %v639
        %v676 = vunpack.c.l.b16 %v640
        %v677 = vunpack.c.l.b16 %v641
        %v678 = vunpack.c.l.b16 %v642
        %v679 = vunpack.c.l.b16 %v643
        %v680 = vunpack.c.l.b16 %v644
        %v681 = vunpack.c.l.b16 %v645
        %v682 = vpack.c.b16 %v667, %v666
        %v683 = vpack.c.b16 %v669, %v668
        %v684 = vpack.c.b16 %v671, %v670
        %v685 = vpack.c.b16 %v673, %v672
        %v686 = vpack.c.b16 %v675, %v674
        %v687 = vpack.c.b16 %v677, %v676
        %v688 = vpack.c.b16 %v679, %v678
        %v689 = vpack.c.b16 %v681, %v680
        %698 = vmatprep.subr.bf16.mxu0 0
        %699 = vmatpush1.bf16.msra.mxu0 %v682
        %700 = vmatprep.subr.bf16.mxu0 0
        %701 = vmatpush1.bf16.msra.mxu0 %v683
        %702 = vmatprep.subr.bf16.mxu0 0
        %703 = vmatpush1.bf16.msra.mxu0 %v684
        %704 = vmatprep.subr.bf16.mxu0 0
        %705 = vmatpush1.bf16.msra.mxu0 %v685
        %706 = vmatprep.subr.bf16.mxu0 0
        %707 = vmatpush1.bf16.msra.mxu0 %v686
        %708 = vmatprep.subr.bf16.mxu0 0
        %709 = vmatpush1.bf16.msra.mxu0 %v687
        %710 = vmatprep.subr.bf16.mxu0 0
        %711 = vmatpush1.bf16.msra.mxu0 %v688
        %712 = vmatprep.subr.bf16.mxu0 0
        %713 = vmatpush1.bf16.msra.mxu0 %v689
        %714 = vmatprep.subr.bf16.mxu0 0
        %715 = vmatpush1.bf16.msra.mxu0 0
        %716 = vmatprep.subr.bf16.mxu0 0
        %717 = vmatpush1.bf16.msra.mxu0 0
        %718 = vmatprep.subr.bf16.mxu0 0
        %719 = vmatpush1.bf16.msra.mxu0 0
        %720 = vmatprep.subr.bf16.mxu0 0
        %721 = vmatpush1.bf16.msra.mxu0 0
        %722 = vmatprep.subr.bf16.mxu0 0
        %723 = vmatpush1.bf16.msra.mxu0 0
        %724 = vmatprep.subr.bf16.mxu0 0
        %725 = vmatpush1.bf16.msra.mxu0 0
        %726 = vmatprep.subr.bf16.mxu0 0
        %727 = vmatpush1.bf16.msra.mxu0 0
        %728 = vmatprep.subr.bf16.mxu0 0
        %729 = vmatpush1.bf16.msra.mxu0 0
        %730 = vmatprep.mubr.bf16.mxu0 0
        %731 = vmatmul.mubr.bf16.gmra.mrb[0].mxu0 %v629
        %v732 = vpop.f32.mrb[0].mxu0
        %v733 = vadd.f32 %v649, %v732
        %v734 = vpop.f32.mrb[0].mxu0
        %v735 = vpop.f32.mrb[0].mxu0
        %v736 = vpop.f32.mrb[0].mxu0
        %737 = vdwg.mxu0
        %v738 = vadd.f32 %v733, %v514
        %739 = vadd.xlane.f32.xlu0 %v738
        %v740 = vpop.xlane.xlu0 %739
        %v741 = vmul.f32 %v740, 0.03125
        %v742 = vsub.f32 %v738, %v741
        %v743 = vmul.f32 %v742, %v408
        %v744 = vmul.f32 %v743, %v743
        %745 = vadd.xlane.f32.xlu0 %v744
        %v746 = vpop.xlane.xlu0 %745
        %v747 = vmul.f32 %v746, 0.03125
        %v748 = vadd.f32 %v747, 1e-05
        %v749 = vrsqrt.pop %v748
        %v750 = vmul.f32 %v743, %v749
        %v751 = vlaneseq
        %v752 = vshrl.u32 %v751, 7
        %v753 = vsub.s32 0, %v752
        %v754 = vrot.slane %v397, %v753
        %v755 = vmul.f32 %v750, %v754
        %v756 = vlaneseq
        %v757 = vshrl.u32 %v756, 7
        %v758 = vsub.s32 0, %v757
        %v759 = vrot.slane %v398, %v758
        %v760 = vadd.f32 %v755, %v759
        %v761 = vpack.c.bf16 %v760, %v760
        %v762 = vld [vmem:[#allocation10] sm:$0xf]
        %v763 = vld [vmem:[#allocation10 + $0x4] sm:$0xf]
        %v764 = vld [vmem:[#allocation10 + $0x8] sm:$0xf]
        %v765 = vld [vmem:[#allocation10 + $0xc] sm:$0xf]
        %v766 = vld [vmem:[#allocation10 + $0x10] sm:$0xf]
        %v767 = vld [vmem:[#allocation10 + $0x14] sm:$0xf]
        %v768 = vld [vmem:[#allocation10 + $0x18] sm:$0xf]
        %v769 = vld [vmem:[#allocation10 + $0x1c] sm:$0xf]
        %v770 = vld [vmem:[#allocation10 + $0x20] sm:$0xf]
        %v771 = vld [vmem:[#allocation10 + $0x24] sm:$0xf]
        %v772 = vld [vmem:[#allocation10 + $0x28] sm:$0xf]
        %v773 = vld [vmem:[#allocation10 + $0x2c] sm:$0xf]
        %v774 = vld [vmem:[#allocation10 + $0x30] sm:$0xf]
        %v775 = vld [vmem:[#allocation10 + $0x34] sm:$0xf]
        %v776 = vld [vmem:[#allocation10 + $0x38] sm:$0xf]
        %v777 = vld [vmem:[#allocation10 + $0x3c] sm:$0xf]
        %v778 = vlaneseq
        %v779 = vshrl.u32 %v778, 7
        %v780 = vsub.s32 0, %v779
        %v781 = vrot.slane %v403, %v780
        %v798 = vunpack.c.l.b16 %v762
        %v799 = vunpack.c.l.b16 %v763
        %v800 = vunpack.c.l.b16 %v764
        %v801 = vunpack.c.l.b16 %v765
        %v802 = vunpack.c.l.b16 %v766
        %v803 = vunpack.c.l.b16 %v767
        %v804 = vunpack.c.l.b16 %v768
        %v805 = vunpack.c.l.b16 %v769
        %v806 = vunpack.c.l.b16 %v770
        %v807 = vunpack.c.l.b16 %v771
        %v808 = vunpack.c.l.b16 %v772
        %v809 = vunpack.c.l.b16 %v773
        %v810 = vunpack.c.l.b16 %v774
        %v811 = vunpack.c.l.b16 %v775
        %v812 = vunpack.c.l.b16 %v776
        %v813 = vunpack.c.l.b16 %v777
        %v814 = vpack.c.b16 %v799, %v798
        %v815 = vpack.c.b16 %v801, %v800
        %v816 = vpack.c.b16 %v803, %v802
        %v817 = vpack.c.b16 %v805, %v804
        %v818 = vpack.c.b16 %v807, %v806
        %v819 = vpack.c.b16 %v809, %v808
        %v820 = vpack.c.b16 %v811, %v810
        %v821 = vpack.c.b16 %v813, %v812
        %830 = vmatprep.subr.bf16.mxu0 0
        %831 = vmatpush1.bf16.msra.mxu0 %v814
        %832 = vmatprep.subr.bf16.mxu0 0
        %833 = vmatpush1.bf16.msra.mxu0 %v815
        %834 = vmatprep.subr.bf16.mxu0 0
        %835 = vmatpush1.bf16.msra.mxu0 %v816
        %836 = vmatprep.subr.bf16.mxu0 0
        %837 = vmatpush1.bf16.msra.mxu0 %v817
        %838 = vmatprep.subr.bf16.mxu0 0
        %839 = vmatpush1.bf16.msra.mxu0 %v818
        %840 = vmatprep.subr.bf16.mxu0 0
        %841 = vmatpush1.bf16.msra.mxu0 %v819
        %842 = vmatprep.subr.bf16.mxu0 0
        %843 = vmatpush1.bf16.msra.mxu0 %v820
        %844 = vmatprep.subr.bf16.mxu0 0
        %845 = vmatpush1.bf16.msra.mxu0 %v821
        %846 = vmatprep.subr.bf16.mxu0 0
        %847 = vmatpush1.bf16.msra.mxu0 0
        %848 = vmatprep.subr.bf16.mxu0 0
        %849 = vmatpush1.bf16.msra.mxu0 0
        %850 = vmatprep.subr.bf16.mxu0 0
        %851 = vmatpush1.bf16.msra.mxu0 0
        %852 = vmatprep.subr.bf16.mxu0 0
        %853 = vmatpush1.bf16.msra.mxu0 0
        %854 = vmatprep.subr.bf16.mxu0 0
        %855 = vmatpush1.bf16.msra.mxu0 0
        %856 = vmatprep.subr.bf16.mxu0 0
        %857 = vmatpush1.bf16.msra.mxu0 0
        %858 = vmatprep.subr.bf16.mxu0 0
        %859 = vmatpush1.bf16.msra.mxu0 0
        %860 = vmatprep.subr.bf16.mxu0 0
        %861 = vmatpush1.bf16.msra.mxu0 0
        %862 = vmatprep.mubr.bf16.mxu0 0
        %863 = vmatmul.mubr.bf16.gmra.mrb[0].mxu0 %v761
        %v864 = vpop.f32.mrb[0].mxu0
        %v865 = vadd.f32 %v781, %v864
        %v866 = vpop.f32.mrb[0].mxu0
        %v867 = vpop.f32.mrb[0].mxu0
        %v868 = vpop.f32.mrb[0].mxu0
        %869 = vdwg.mxu0
        %v870 = vmax.f32 %v865, 0.0
        %v871 = vpack.c.bf16 %v870, %v870
        %v872 = vld [vmem:[#allocation11] sm:$0xf]
        %v873 = vld [vmem:[#allocation11 + $0x4] sm:$0xf]
        %v874 = vld [vmem:[#allocation11 + $0x8] sm:$0xf]
        %v875 = vld [vmem:[#allocation11 + $0xc] sm:$0xf]
        %v876 = vld [vmem:[#allocation11 + $0x10] sm:$0xf]
        %v877 = vld [vmem:[#allocation11 + $0x14] sm:$0xf]
        %v878 = vld [vmem:[#allocation11 + $0x18] sm:$0xf]
        %v879 = vld [vmem:[#allocation11 + $0x1c] sm:$0xf]
        %v880 = vld [vmem:[#allocation11 + $0x20] sm:$0xf]
        %v881 = vld [vmem:[#allocation11 + $0x24] sm:$0xf]
        %v882 = vld [vmem:[#allocation11 + $0x28] sm:$0xf]
        %v883 = vld [vmem:[#allocation11 + $0x2c] sm:$0xf]
        %v884 = vld [vmem:[#allocation11 + $0x30] sm:$0xf]
        %v885 = vld [vmem:[#allocation11 + $0x34] sm:$0xf]
        %v886 = vld [vmem:[#allocation11 + $0x38] sm:$0xf]
        %v887 = vld [vmem:[#allocation11 + $0x3c] sm:$0xf]
        %v888 = vlaneseq
        %v889 = vshrl.u32 %v888, 7
        %v890 = vsub.s32 0, %v889
        %v891 = vrot.slane %v399, %v890
        %v908 = vunpack.c.l.b16 %v872
        %v909 = vunpack.c.l.b16 %v873
        %v910 = vunpack.c.l.b16 %v874
        %v911 = vunpack.c.l.b16 %v875
        %v912 = vunpack.c.l.b16 %v876
        %v913 = vunpack.c.l.b16 %v877
        %v914 = vunpack.c.l.b16 %v878
        %v915 = vunpack.c.l.b16 %v879
        %v916 = vunpack.c.l.b16 %v880
        %v917 = vunpack.c.l.b16 %v881
        %v918 = vunpack.c.l.b16 %v882
        %v919 = vunpack.c.l.b16 %v883
        %v920 = vunpack.c.l.b16 %v884
        %v921 = vunpack.c.l.b16 %v885
        %v922 = vunpack.c.l.b16 %v886
        %v923 = vunpack.c.l.b16 %v887
        %v924 = vpack.c.b16 %v909, %v908
        %v925 = vpack.c.b16 %v911, %v910
        %v926 = vpack.c.b16 %v913, %v912
        %v927 = vpack.c.b16 %v915, %v914
        %v928 = vpack.c.b16 %v917, %v916
        %v929 = vpack.c.b16 %v919, %v918
        %v930 = vpack.c.b16 %v921, %v920
        %v931 = vpack.c.b16 %v923, %v922
        %940 = vmatprep.subr.bf16.mxu0 0
        %941 = vmatpush1.bf16.msra.mxu0 %v924
        %942 = vmatprep.subr.bf16.mxu0 0
        %943 = vmatpush1.bf16.msra.mxu0 %v925
        %944 = vmatprep.subr.bf16.mxu0 0
        %945 = vmatpush1.bf16.msra.mxu0 %v926
        %946 = vmatprep.subr.bf16.mxu0 0
        %947 = vmatpush1.bf16.msra.mxu0 %v927
        %948 = vmatprep.subr.bf16.mxu0 0
        %949 = vmatpush1.bf16.msra.mxu0 %v928
        %950 = vmatprep.subr.bf16.mxu0 0
        %951 = vmatpush1.bf16.msra.mxu0 %v929
        %952 = vmatprep.subr.bf16.mxu0 0
        %953 = vmatpush1.bf16.msra.mxu0 %v930
        %954 = vmatprep.subr.bf16.mxu0 0
        %955 = vmatpush1.bf16.msra.mxu0 %v931
        %956 = vmatprep.subr.bf16.mxu0 0
        %957 = vmatpush1.bf16.msra.mxu0 0
        %958 = vmatprep.subr.bf16.mxu0 0
        %959 = vmatpush1.bf16.msra.mxu0 0
        %960 = vmatprep.subr.bf16.mxu0 0
        %961 = vmatpush1.bf16.msra.mxu0 0
        %962 = vmatprep.subr.bf16.mxu0 0
        %963 = vmatpush1.bf16.msra.mxu0 0
        %964 = vmatprep.subr.bf16.mxu0 0
        %965 = vmatpush1.bf16.msra.mxu0 0
        %966 = vmatprep.subr.bf16.mxu0 0
        %967 = vmatpush1.bf16.msra.mxu0 0
        %968 = vmatprep.subr.bf16.mxu0 0
        %969 = vmatpush1.bf16.msra.mxu0 0
        %970 = vmatprep.subr.bf16.mxu0 0
        %971 = vmatpush1.bf16.msra.mxu0 0
        %972 = vmatprep.mubr.bf16.mxu0 0
        %973 = vmatmul.mubr.bf16.gmra.mrb[0].mxu0 %v871
        %v974 = vpop.f32.mrb[0].mxu0
        %v975 = vadd.f32 %v891, %v974
        %v976 = vpop.f32.mrb[0].mxu0
        %v977 = vpop.f32.mrb[0].mxu0
        %v978 = vpop.f32.mrb[0].mxu0
        %979 = vdwg.mxu0
        %v980 = vadd.f32 %v975, %v760
        %981 = vadd.xlane.f32.xlu0 %v980
        %v982 = vpop.xlane.xlu0 %981
        %v983 = vmul.f32 %v982, 0.03125
        %v984 = vsub.f32 %v980, %v983
        %v985 = vmul.f32 %v984, %v408
        %v986 = vmul.f32 %v985, %v985
        %987 = vadd.xlane.f32.xlu0 %v986
        %v988 = vpop.xlane.xlu0 %987
        %v989 = vmul.f32 %v988, 0.03125
        %v990 = vadd.f32 %v989, 1e-05
        %v991 = vrsqrt.pop %v990
        %v992 = vmul.f32 %v985, %v991
        %v993 = vlaneseq
        %v994 = vshrl.u32 %v993, 7
        %v995 = vsub.s32 0, %v994
        %v996 = vrot.slane %v400, %v995
        %v997 = vmul.f32 %v992, %v996
        %v998 = vlaneseq
        %v999 = vshrl.u32 %v998, 7
        %v1000 = vsub.s32 0, %v999
        %v1001 = vrot.slane %v401, %v1000
        %v1002 = vadd.f32 %v997, %v1001
        %1003 = vst [vmem:[%s393] sm:$0xff] %v1002
        %s1004 = sand.u32 %s209, 1
        %s1005 = scalar_lea.sflag [#allocation4], %s1004
        %s1006 = sand.u32 %s209, 1
        %s1007 = smul.addr %s1006, 8
        %s1008 = scalar_lea.vmem [#allocation13], %s1007
        // Predicated region
        $region77: #{tpu_custom_call.1} parent=51 // pred_check
          %p1009 = pneg %p219
        $region78: #{tpu_custom_call.1} parent=51 // pred_check_branch
          %1011 = sbr.rel (%p1009) target = $region80
        $region79: #{tpu_custom_call.1} parent=51 // pred_region
          %s1013 = ssub.s32 128, 128
          %1014 = vsyncadd %s1005, %s1013
          %s1015 = smul.addr %s28, 128
          %s1016 = scalar_lea.hbm %s8, %s1015
          %s1018 = sshll.u32 %s1008, 4
          %s1019 = int_to_ptr.vmem [resolvable:$true] %s1018
          %1021 = dma.vmem_to_hbm [thread:$0]  %s1019, 128, %s1016, %s1005
        $region80: #{tpu_custom_call.1} parent=51 // pred_fallthru
          _
      $region52: #{tpu_custom_call.1} parent=5 // pred_fallthru
        _
      %p1022 = scmp.le.s32.totalorder 2, %s23
      // Predicated region
      $region81: #{tpu_custom_call.1} parent=5 // pred_check
        %p1023 = pneg %p1022
      $region82: #{tpu_custom_call.1} parent=5 // pred_check_branch
        %1025 = sbr.rel (%p1023) target = $region84
      $region83: #{tpu_custom_call.1} parent=5 // pred_region
        %s1026 = ssub.s32 %s23, 2
        // Predicated region
        $region85: #{tpu_custom_call.1} parent=83 // pred_check
          %p1027 = pneg %p225
        $region86: #{tpu_custom_call.1} parent=83 // pred_check_branch
          %1029 = sbr.rel (%p1027) target = $region88
        $region87: #{tpu_custom_call.1} parent=83 // pred_region
          %s1030 = sand.u32 %s210, 1
          %s1031 = scalar_lea.sflag [#allocation4], %s1030
          %s1032 = sand.u32 %s210, 1
          %s1033 = smul.addr %s1032, 8
          %s1034 = scalar_lea.vmem [#allocation13], %s1033
          %1035 = dma.done %s1031, 128
        $region88: #{tpu_custom_call.1} parent=83 // pred_fallthru
          _
      $region84: #{tpu_custom_call.1} parent=5 // pred_fallthru
        _
    $region6: #{tpu_custom_call.1} parent=1 // loop_footer
      %s27 = sadd.s32 1, %s23
    $region7: #{tpu_custom_call.1} parent=1 // loop_footer_branch
      %22 = sbr.rel target = $region3
    $region8: #{tpu_custom_call.1} parent=1 // loop_exit
      _
    %1036 = vsyncpa [#allocation3], 1
    %s1037 = scalar_lea.sflag [#allocation3], 1
    %1038 = vsyncpa %s1037, 1
    %1039 = vsyncpa [#allocation6], 1
    %1040 = vsyncpa [#allocation9], 1
    %1041 = vsyncpa [#allocation12], 1
    %1042 = vsyncpa [#allocation4], 1
    %s1043 = scalar_lea.sflag [#allocation4], 1
    %1044 = vsyncpa %s1043, 1

</llo_original>
